<compile_context>
chip_gen: v7x
topology: tpu7x:2x2x1
jax: 0.10.0
libtpu: 0.0.40
codegen_flags: <defaults>
</compile_context>

<pallas_src>
import functools
import math

import jax
import jax.numpy as jnp
from jax.experimental import pallas as pl
from jax.experimental.pallas import tpu as pltpu

LANE = 128


def build_positional_encodings(max_len: int, hid_dim: int) -> jnp.ndarray:
    """Replicates the PyTorch __init__ PE table. Shape (max_len, hid_dim), f32."""
    assert hid_dim % 2 == 0
    pos = jnp.arange(0, max_len, dtype=jnp.float32)[:, None]                # (max_len, 1)
    div_term = jnp.exp(-jnp.arange(0, hid_dim, 2, dtype=jnp.float32)
                       * (math.log(10000.0) / hid_dim))                     # (hid_dim/2,)
    pe = jnp.zeros((max_len, hid_dim), dtype=jnp.float32)
    pe = pe.at[:, 0::2].set(jnp.sin(pos * div_term))
    pe = pe.at[:, 1::2].set(jnp.cos(pos * div_term))
    return pe


def _dropout_thresh_u32(p: float) -> int:
    # P(drop) = thresh / 2**32 ~= p  (uniform uint32 draw)
    return min(int(round(p * 4294967296.0)), 4294967295)


def _pe_add_kernel(x_ref, pe_ref, o_ref):
    # Eval mode / p == 0: dropout is the identity.
    o_ref[...] = (x_ref[...] + pe_ref[...]).astype(o_ref.dtype)


def _pe_add_dropout_hw_kernel(seed_ref, x_ref, pe_ref, o_ref, *, p: float):
    # TODO(synk): RNG stream differs from torch.nn.Dropout (no bitwise parity possible).
    y = x_ref[...] + pe_ref[...]
    # Unique stream per (seq_tile, batch) grid step; mixing separate seed words
    # avoids the correlated-consecutive-seed issue of seed+step.
    pltpu.prng_seed(seed_ref[0], pl.program_id(0), pl.program_id(1))
    bits = pltpu.prng_random_bits(y.shape)
    if bits.dtype != jnp.uint32:
        bits = pltpu.bitcast(bits, jnp.uint32)
    keep = bits >= jnp.uint32(_dropout_thresh_u32(p))
    o_ref[...] = jnp.where(keep, y * (1.0 / (1.0 - p)),
                           jnp.zeros_like(y)).astype(o_ref.dtype)


def _pe_add_dropout_bits_kernel(x_ref, pe_ref, bits_ref, o_ref, *, p: float):
    # Portable dropout path: uniform uint32 bits are generated on the host
    # (works under interpret mode where the TPU hardware PRNG has no lowering).
    y = x_ref[...] + pe_ref[...]
    keep = bits_ref[...] >= jnp.uint32(_dropout_thresh_u32(p))
    o_ref[...] = jnp.where(keep, y * (1.0 / (1.0 - p)),
                           jnp.zeros_like(y)).astype(o_ref.dtype)


def positional_encoding_forward(x: jnp.ndarray,
                                pe_table: jnp.ndarray,
                                *,
                                dropout_p: float = 0.2,
                                train: bool = False,
                                seed: int = 0) -> jnp.ndarray:
    """x: (B, S, H); pe_table: (max_len, H) f32. Returns (B, S, H) in x.dtype."""
    B, S, H = x.shape
    # PE is kept in f32 like PyTorch; cast to x.dtype host-side so its HBM traffic
    # matches x.  (Tiny numeric delta vs torch for sub-f32 x; documented.)
    pe = pe_table[:S, :].astype(x.dtype)                                    # (S, H)
    itemsize = jnp.dtype(x.dtype).itemsize
    N = S * H

    use_dropout = bool(train) and float(dropout_p) > 0.0
    use_hw_prng = use_dropout and jax.default_backend() == "tpu"
    use_host_bits = use_dropout and not use_hw_prng

    # Layout: lane-dense (rows, 128) view when S*H is a multiple of 128 (zero-copy
    # reshape); otherwise tile (S, H) directly.  No pad/slice full-array copies.
    if N % LANE == 0:
        rows, cols = N // LANE, LANE
        x_view = x.reshape(B, rows, cols)
        pe_view = pe.reshape(rows, cols)
    else:
        rows, cols = S, H
        x_view = x
        pe_view = pe

    # Row-tile sizing: ~4 MiB tiles (2 MiB when an extra bits stream is live) so the
    # double-buffered working set stays well under the explicit 32 MiB VMEM limit on
    # every generation (v5e scoped default is only 16 MiB, hence the explicit bump).
    tile_bytes = (2 << 20) if use_host_bits else (4 << 20)
    row_bytes = cols * itemsize
    target_rows = max(8, (tile_bytes // row_bytes) // 8 * 8)
    TR = rows if rows <= target_rows else target_rows
    num_tiles = pl.cdiv(rows, TR)

    # x / out: batch dim squeezed; batch is the innermost grid axis so the PE block
    # index is constant across it (PE re-fetched at most once per seq tile).
    x_spec = pl.BlockSpec((pl.Squeezed(), TR, cols), lambda j, b, *_: (b, j, 0))
    out_spec = pl.BlockSpec((pl.Squeezed(), TR, cols), lambda j, b, *_: (b, j, 0))

    pe_bytes = rows * cols * itemsize
    if num_tiles == 1 or pe_bytes <= (2 << 20):
        # Small PE: keep the whole table resident in VMEM, DMA'd from HBM once.
        pe_spec = pl.BlockSpec((rows, cols), lambda j, b, *_: (0, 0))
    else:
        pe_spec = pl.BlockSpec((TR, cols), lambda j, b, *_: (j, 0))

    compiler_params = pltpu.CompilerParams(
        dimension_semantics=("parallel", "parallel"),
        vmem_limit_bytes=32 * 1024 * 1024,
    )
    out_shape = jax.ShapeDtypeStruct((B, rows, cols), x.dtype)
    base_bytes = (2 * B + 1) * rows * cols * itemsize   # read x + pe, write out
    flops = B * rows * cols

    if not use_dropout:
        out_view = pl.pallas_call(
            _pe_add_kernel,
            out_shape=out_shape,
            grid_spec=pltpu.PrefetchScalarGridSpec(
                num_scalar_prefetch=0,
                grid=(num_tiles, B),
                in_specs=[x_spec, pe_spec],
                out_specs=out_spec),
            compiler_params=compiler_params,
            cost_estimate=pl.CostEstimate(flops=flops, transcendentals=0,
                                          bytes_accessed=base_bytes),
        )(x_view, pe_view)
    elif use_hw_prng:
        kernel = functools.partial(_pe_add_dropout_hw_kernel, p=float(dropout_p))
        seed_arr = jnp.array([seed], dtype=jnp.int32)
        out_view = pl.pallas_call(
            kernel,
            out_shape=out_shape,
            grid_spec=pltpu.PrefetchScalarGridSpec(
                num_scalar_prefetch=1,
                grid=(num_tiles, B),
                in_specs=[x_spec, pe_spec],
                out_specs=out_spec),
            compiler_params=compiler_params,
            cost_estimate=pl.CostEstimate(flops=2 * flops, transcendentals=0,
                                          bytes_accessed=base_bytes),
        )(seed_arr, x_view, pe_view)
    else:
        kernel = functools.partial(_pe_add_dropout_bits_kernel, p=float(dropout_p))
        bits = jax.random.bits(jax.random.PRNGKey(seed), (B, rows, cols),
                               dtype=jnp.uint32)
        bits_spec = pl.BlockSpec((pl.Squeezed(), TR, cols), lambda j, b, *_: (b, j, 0))
        out_view = pl.pallas_call(
            kernel,
            out_shape=out_shape,
            grid_spec=pltpu.PrefetchScalarGridSpec(
                num_scalar_prefetch=0,
                grid=(num_tiles, B),
                in_specs=[x_spec, pe_spec, bits_spec],
                out_specs=out_spec),
            compiler_params=compiler_params,
            cost_estimate=pl.CostEstimate(flops=2 * flops, transcendentals=0,
                                          bytes_accessed=base_bytes + B * rows * cols * 4),
        )(x_view, pe_view, bits)

    return out_view.reshape(B, S, H)


if __name__ == "__main__":
    B, S, H = 2, 8, 32
    MAX_LEN = 64  # small stand-in for max_len=5000; only the first S rows are used
    P = 0.2

    key = jax.random.PRNGKey(0)
    x = jax.random.normal(key, (B, S, H), dtype=jnp.float32)
    pe_table = build_positional_encodings(MAX_LEN, H)

    # --- Eval-mode forward (dropout is identity) -> deterministic, matches .eval() ---
    out = positional_encoding_forward(x, pe_table, dropout_p=P, train=False)
    out = jax.block_until_ready(out)

    ref = x + pe_table[None, :S, :]
    assert out.shape == (B, S, H)
    assert jnp.allclose(out, ref, atol=1e-6, rtol=1e-6)

    # --- Train-mode smoke test: every output is 0 (dropped) or ref/(1-p) (kept) ---
    out_tr = positional_encoding_forward(x, pe_table, dropout_p=P, train=True, seed=123)
    out_tr = jax.block_until_ready(out_tr)
    assert out_tr.shape == (B, S, H)
    kept = out_tr != 0.0
    scaled_ref = ref * (1.0 / (1.0 - P))
    assert jnp.allclose(jnp.where(kept, out_tr, scaled_ref), scaled_ref,
                        atol=1e-5, rtol=1e-5)
    n_kept = int(jnp.sum(kept))
    assert 0 < n_kept < B * S * H  # some dropped, some kept

    print("KERNEL_OK")
</pallas_src>

<mosaic_0001>
module attributes {stable_mosaic.version = 11 : i64} {
  func.func @_pe_add_kernel(%arg0: i32, %arg1: i32, %arg2: memref<1x2x128xf32, #tpu.memory_space<vmem>>, %arg3: memref<2x128xf32, #tpu.memory_space<vmem>>, %arg4: memref<1x2x128xf32, #tpu.memory_space<vmem>>) attributes {dimension_semantics = [#tpu.dimension_semantics<parallel>, #tpu.dimension_semantics<parallel>], iteration_bounds = array<i64: 1, 2>, scalar_prefetch = 0 : i64, scratch_operands = 0 : i64, tpu.core_type = #tpu.core_type<tc>, window_params = [{transform_indices = @transform_0, window_bounds = array<i64: 1, 2, 128>}, {pipeline_mode = #tpu.pipeline_mode<synchronous>, transform_indices = @transform_1, window_bounds = array<i64: 2, 128>}, {transform_indices = @transform_2, window_bounds = array<i64: 1, 2, 128>}]} {
    %c0 = arith.constant 0 : index
    %c0_0 = arith.constant 0 : index
    %c0_1 = arith.constant 0 : index
    %0 = vector.load %arg2[%c0, %c0_0, %c0_1] : memref<1x2x128xf32, #tpu.memory_space<vmem>>, vector<1x2x128xf32>
    %1 = vector.shape_cast %0 : vector<1x2x128xf32> to vector<2x128xf32>
    %c0_2 = arith.constant 0 : index
    %c0_3 = arith.constant 0 : index
    %2 = vector.load %arg3[%c0_2, %c0_3] : memref<2x128xf32, #tpu.memory_space<vmem>>, vector<2x128xf32>
    %3 = arith.addf %1, %2 : vector<2x128xf32>
    %c0_4 = arith.constant 0 : index
    %c0_5 = arith.constant 0 : index
    %c0_6 = arith.constant 0 : index
    %4 = vector.load %arg4[%c0_4, %c0_5, %c0_6] : memref<1x2x128xf32, #tpu.memory_space<vmem>>, vector<1x2x128xf32>
    %5 = vector.shape_cast %4 : vector<1x2x128xf32> to vector<2x128xf32>
    %6 = vector.shape_cast %3 : vector<2x128xf32> to vector<1x2x128xf32>
    tpu.vector_store %arg4[%c0_4, %c0_5, %c0_6], %6 {strides = array<i32>} : memref<1x2x128xf32, #tpu.memory_space<vmem>>, vector<1x2x128xf32>,
    return
  }
  func.func @transform_0(%arg0: i32, %arg1: i32) -> (i32, i32, i32) {
    %c0_i32 = arith.constant 0 : i32
    %c0_i32_0 = arith.constant 0 : i32
    return %arg1, %arg0, %c0_i32 : i32, i32, i32
  }
  func.func @transform_1(%arg0: i32, %arg1: i32) -> (i32, i32) {
    %c0_i32 = arith.constant 0 : i32
    %c0_i32_0 = arith.constant 0 : i32
    %c0_i32_1 = arith.constant 0 : i32
    return %c0_i32, %c0_i32_0 : i32, i32
  }
  func.func @transform_2(%arg0: i32, %arg1: i32) -> (i32, i32, i32) {
    %c0_i32 = arith.constant 0 : i32
    %c0_i32_0 = arith.constant 0 : i32
    return %arg1, %arg0, %c0_i32 : i32, i32, i32
  }
}

</mosaic_0001>

<llo_original>
// kernel: tpu_custom_call.1
$region0: #{tpu_custom_call.1}
  #allocation0 [shape = 'u32[]', space=smem, size = 0x4, offset = 0x4, fixed_abs, tag = 'smem constant byte address 0x4 - core index']
  #allocation1 [shape = 'u32[144,128]{1,0:T(1,128)}', space=vmem, size = 0x12000, scoped, tag = 'internal scratch']
  %s0 = inlined_call_operand.hbm [shape: f32[2,2,128], index: 0, kind: input, shape index: {}]
  %s1 = inlined_call_operand.vmem [shape: f32[2,128], index: 1, kind: input, shape index: {}]
  %s2 = inlined_call_operand.hbm [shape: f32[2,2,128], index: 2, kind: output, shape index: {}]
  %s3 = sld [smem:[#allocation0]]
  $region45: #{tpu_custom_call.1} parent=0
    _
  %s5 = ssub.s32 1, %s3
  %s6 = scalar_select 0, %s5, %s3
  $region1: #{tpu_custom_call.1} parent=0
    #allocation2 [shape = 'u8[2048]{0}', space=vmem, size = 0x800, scoped, tag = 'input window, operand 0']
    #allocation3 [shape = 's32[2]{0}', space=sflag, size = 0x8, scoped, tag = 'scoped memory for tpu_custom_call.1']
    #allocation4 [shape = 's32[2]{0}', space=sflag, size = 0x8, scoped, tag = 'scoped memory for tpu_custom_call.1']
    #allocation5 [shape = 'u8[2048]{0}', space=vmem, size = 0x800, scoped, tag = 'output window, operand 0']
    %7 = vsyncpa [#allocation3], 0
    %s8 = scalar_lea.sflag [#allocation3], 1
    %9 = vsyncpa %s8, 0
    %10 = vsyncpa [#allocation4], 0
    %s11 = scalar_lea.sflag [#allocation4], 1
    %12 = vsyncpa %s11, 0
    loop: start=0, step=1, limit=4
    $region2: #{tpu_custom_call.1} parent=1 // loop_pre_header
      _
    $region3: #{tpu_custom_call.1} parent=1 // loop_header
      %s14 = sphi 0, %s18
      %p15 = scmp.ge.s32.totalorder %s14, 4
      %s21 = sphi 0, %s33
      %s22 = sphi 0, %s29
      %s23 = sphi 0, %s21
      %s24 = sphi 0, %s22
      %s25 = sphi 0, %s23
      %s26 = sphi 0, %s24
      %s38 = sphi 0, %s40
      %s41 = sphi 0, %s38
      %s42 = sphi 0, %s41
      %s58 = sphi 0, %s42
      %s62 = sphi 0, %s62
      %s64 = sphi 0, %s62
      %s65 = sphi 0, %s64
      %s79 = sphi 0, %s65
      %s87 = sphi 0, %s89
      %s90 = sphi 0, %s87
      %s91 = sphi 0, %s90
      %s107 = sphi 0, %s91
    $region4: #{tpu_custom_call.1} parent=1 // loop_header_branch
      %17 = sbr.rel (%p15) target = $region8
    $region5: #{tpu_custom_call.1} parent=1 // loop_body
      %s19 = ssub.s32 %s14, 1
      %s20 = ssub.s32 %s14, 2
      %s27 = sadd.s32 1, %s22
      %p28 = scmp.ge.s32.totalorder %s27, 2
      %s29 = scalar_select %p28, 0, %s27
      %s30 = sadd.s32 1, %s21
      %s31 = scalar_select %p28, %s30, %s21
      %p32 = scmp.ge.s32.totalorder %s31, 1
      %s33 = scalar_select %p32, 0, %s31
      %s34 = ssub.s32 %s22, %s29
      %s35 = ssub.s32 %s21, %s33
      %s36 = sor.u32 %s34, %s35
      %p37 = scmp.eq.s32.totalorder %s36, 0
      %s39 = sadd.s32 %s38, 1
      %s40 = scalar_select %p37, %s38, %s39
      %p43 = pneg %p37
      %p44 = scmp.eq.s32.totalorder %s14, 1
      %p45 = por %p43, %p44
      %p46 = scmp.ne.s32.totalorder %s38, %s41
      %p47 = scmp.eq.s32.totalorder %s14, 0
      %p48 = por %p46, %p47
      %p49 = scmp.ne.s32.totalorder %s38, %s41
      %p50 = scmp.eq.s32.totalorder %s19, 1
      %p51 = por %p49, %p50
      %p52 = scmp.ne.s32.totalorder %s41, %s42
      %p53 = scmp.eq.s32.totalorder %s19, 0
      %p54 = por %p52, %p53
      %p55 = scmp.ne.s32.totalorder %s41, %s42
      %p56 = scmp.eq.s32.totalorder %s20, 1
      %p57 = por %p55, %p56
      %p59 = scmp.ne.s32.totalorder %s42, %s58
      %p60 = scmp.eq.s32.totalorder %s20, 0
      %p61 = por %p59, %p60
      %s63 = sadd.s32 %s62, 1
      %p66 = scmp.eq.s32.totalorder %s14, 1
      %p67 = scmp.ne.s32.totalorder %s62, %s64
      %p68 = scmp.eq.s32.totalorder %s14, 0
      %p69 = por %p67, %p68
      %p70 = scmp.ne.s32.totalorder %s62, %s64
      %p71 = scmp.eq.s32.totalorder %s19, 1
      %p72 = por %p70, %p71
      %p73 = scmp.ne.s32.totalorder %s64, %s65
      %p74 = scmp.eq.s32.totalorder %s19, 0
      %p75 = por %p73, %p74
      %p76 = scmp.ne.s32.totalorder %s64, %s65
      %p77 = scmp.eq.s32.totalorder %s20, 1
      %p78 = por %p76, %p77
      %p80 = scmp.ne.s32.totalorder %s65, %s79
      %p81 = scmp.eq.s32.totalorder %s20, 0
      %p82 = por %p80, %p81
      %s83 = ssub.s32 %s22, %s29
      %s84 = ssub.s32 %s21, %s33
      %s85 = sor.u32 %s83, %s84
      %p86 = scmp.eq.s32.totalorder %s85, 0
      %s88 = sadd.s32 %s87, 1
      %s89 = scalar_select %p86, %s87, %s88
      %p92 = pneg %p86
      %p93 = scmp.eq.s32.totalorder %s14, 1
      %p94 = por %p92, %p93
      %p95 = scmp.ne.s32.totalorder %s87, %s90
      %p96 = scmp.eq.s32.totalorder %s14, 0
      %p97 = por %p95, %p96
      %p98 = scmp.ne.s32.totalorder %s87, %s90
      %p99 = scmp.eq.s32.totalorder %s19, 1
      %p100 = por %p98, %p99
      %p101 = scmp.ne.s32.totalorder %s90, %s91
      %p102 = scmp.eq.s32.totalorder %s19, 0
      %p103 = por %p101, %p102
      %p104 = scmp.ne.s32.totalorder %s90, %s91
      %p105 = scmp.eq.s32.totalorder %s20, 1
      %p106 = por %p104, %p105
      %p108 = scmp.ne.s32.totalorder %s91, %s107
      %p109 = scmp.eq.s32.totalorder %s20, 0
      %p110 = por %p108, %p109
      %p111 = scmp.le.s32.totalorder 1, %s14
      %p112 = scmp.lt.s32.totalorder %s14, 3
      %p113 = pnand %p111, %p112
      %p114 = pneg %p113
      // Predicated region
      $region9: #{tpu_custom_call.1} parent=5 // pred_check
        _
      $region10: #{tpu_custom_call.1} parent=5 // pred_check_branch
        %116 = sbr.rel (%p113) target = $region12
      $region11: #{tpu_custom_call.1} parent=5 // pred_region
        %s117 = ssub.s32 %s14, 1
        // Predicated region
        $region13: #{tpu_custom_call.1} parent=11 // pred_check
          %p118 = pneg %p75
        $region14: #{tpu_custom_call.1} parent=11 // pred_check_branch
          %120 = sbr.rel (%p118) target = $region16
        $region15: #{tpu_custom_call.1} parent=11 // pred_region
          _
        $region16: #{tpu_custom_call.1} parent=11 // pred_fallthru
          _
      $region12: #{tpu_custom_call.1} parent=5 // pred_fallthru
        _
      %p121 = scmp.lt.s32.totalorder %s14, 2
      // Predicated region
      $region17: #{tpu_custom_call.1} parent=5 // pred_check
        %p122 = pneg %p121
      $region18: #{tpu_custom_call.1} parent=5 // pred_check_branch
        %124 = sbr.rel (%p122) target = $region20
      $region19: #{tpu_custom_call.1} parent=5 // pred_region
        // Predicated region
        $region21: #{tpu_custom_call.1} parent=19 // pred_check
          %p125 = pneg %p48
        $region22: #{tpu_custom_call.1} parent=19 // pred_check_branch
          %127 = sbr.rel (%p125) target = $region24
        $region23: #{tpu_custom_call.1} parent=19 // pred_region
          %s128 = sand.u32 %s38, 1
          %s129 = scalar_lea.sflag [#allocation3], %s128
          %s130 = sand.u32 %s38, 1
          %s131 = smul.addr %s130, 2
          %s132 = scalar_lea.vmem [#allocation2], %s131
          %s134 = ssub.s32 32, 32
          %135 = vsyncadd %s129, %s134
          %s136 = sadd.s32 %s21, %s22
          %s137 = smul.addr %s136, 32
          %s138 = scalar_lea.hbm %s0, %s137
          %s140 = sshll.u32 %s132, 4
          %s141 = int_to_ptr.vmem [resolvable:$true] %s140
          %143 = dma.hbm_to_vmem [thread:$0]  %s138, 32, %s141, %s129
        $region24: #{tpu_custom_call.1} parent=19 // pred_fallthru
          _
      $region20: #{tpu_custom_call.1} parent=5 // pred_fallthru
        _
      %p144 = scmp.le.s32.totalorder 1, %s14
      %p145 = scmp.lt.s32.totalorder %s14, 3
      %p146 = pnand %p144, %p145
      %p147 = pneg %p146
      // Predicated region
      $region25: #{tpu_custom_call.1} parent=5 // pred_check
        _
      $region26: #{tpu_custom_call.1} parent=5 // pred_check_branch
        %149 = sbr.rel (%p146) target = $region28
      $region27: #{tpu_custom_call.1} parent=5 // pred_region
        %s150 = ssub.s32 %s14, 1
        %s151 = sand.u32 %s41, 1
        %s152 = scalar_lea.sflag [#allocation3], %s151
        %s153 = sand.u32 %s41, 1
        %s154 = smul.addr %s153, 2
        %s155 = scalar_lea.vmem [#allocation2], %s154
        // Predicated region
        $region29: #{tpu_custom_call.1} parent=27 // pred_check
          %p156 = pneg %p54
        $region30: #{tpu_custom_call.1} parent=27 // pred_check_branch
          %158 = sbr.rel (%p156) target = $region32
        $region31: #{tpu_custom_call.1} parent=27 // pred_region
          %159 = dma.done %s152, 32
        $region32: #{tpu_custom_call.1} parent=27 // pred_fallthru
          _
        %s160 = sand.u32 %s41, 1
        %s161 = scalar_lea.sflag [#allocation3], %s160
        %s162 = sand.u32 %s41, 1
        %s163 = smul.addr %s162, 2
        %s164 = scalar_lea.vmem [#allocation2], %s163
        %p165 = pneg %p54
        %p166 = pneg %p51
        %p167 = pneg %p75
        %p168 = pneg %p72
        %p169 = pneg %p103
        %p170 = pneg %p100
        %s171 = sand.u32 %s90, 1
        %s172 = scalar_lea.sflag [#allocation4], %s171
        %s173 = sand.u32 %s90, 1
        %s174 = smul.addr %s173, 2
        %s175 = scalar_lea.vmem [#allocation5], %s174
        %v176 = vld [vmem:[%s155] sm:$0x3]
        %v177 = vld [vmem:[%s1] sm:$0x3]
        %v178 = vadd.f32 %v176, %v177
        %179 = vst [vmem:[%s175] sm:$0x3] %v178
        %s180 = sand.u32 %s90, 1
        %s181 = scalar_lea.sflag [#allocation4], %s180
        %s182 = sand.u32 %s90, 1
        %s183 = smul.addr %s182, 2
        %s184 = scalar_lea.vmem [#allocation5], %s183
        // Predicated region
        $region33: #{tpu_custom_call.1} parent=27 // pred_check
          %p185 = pneg %p100
        $region34: #{tpu_custom_call.1} parent=27 // pred_check_branch
          %187 = sbr.rel (%p185) target = $region36
        $region35: #{tpu_custom_call.1} parent=27 // pred_region
          %s189 = ssub.s32 32, 32
          %190 = vsyncadd %s181, %s189
          %s191 = sadd.s32 %s23, %s24
          %s192 = smul.addr %s191, 32
          %s193 = scalar_lea.hbm %s2, %s192
          %s195 = sshll.u32 %s184, 4
          %s196 = int_to_ptr.vmem [resolvable:$true] %s195
          %198 = dma.vmem_to_hbm [thread:$0]  %s196, 32, %s193, %s181
        $region36: #{tpu_custom_call.1} parent=27 // pred_fallthru
          _
      $region28: #{tpu_custom_call.1} parent=5 // pred_fallthru
        _
      %p199 = scmp.le.s32.totalorder 2, %s14
      // Predicated region
      $region37: #{tpu_custom_call.1} parent=5 // pred_check
        %p200 = pneg %p199
      $region38: #{tpu_custom_call.1} parent=5 // pred_check_branch
        %202 = sbr.rel (%p200) target = $region40
      $region39: #{tpu_custom_call.1} parent=5 // pred_region
        %s203 = ssub.s32 %s14, 2
        // Predicated region
        $region41: #{tpu_custom_call.1} parent=39 // pred_check
          %p204 = pneg %p106
        $region42: #{tpu_custom_call.1} parent=39 // pred_check_branch
          %206 = sbr.rel (%p204) target = $region44
        $region43: #{tpu_custom_call.1} parent=39 // pred_region
          %s207 = sand.u32 %s91, 1
          %s208 = scalar_lea.sflag [#allocation4], %s207
          %s209 = sand.u32 %s91, 1
          %s210 = smul.addr %s209, 2
          %s211 = scalar_lea.vmem [#allocation5], %s210
          %212 = dma.done %s208, 32
        $region44: #{tpu_custom_call.1} parent=39 // pred_fallthru
          _
      $region40: #{tpu_custom_call.1} parent=5 // pred_fallthru
        _
    $region6: #{tpu_custom_call.1} parent=1 // loop_footer
      %s18 = sadd.s32 1, %s14
    $region7: #{tpu_custom_call.1} parent=1 // loop_footer_branch
      %13 = sbr.rel target = $region3
    $region8: #{tpu_custom_call.1} parent=1 // loop_exit
      _
    %213 = vsyncpa [#allocation3], 1
    %s214 = scalar_lea.sflag [#allocation3], 1
    %215 = vsyncpa %s214, 1
    %216 = vsyncpa [#allocation4], 1
    %s217 = scalar_lea.sflag [#allocation4], 1
    %218 = vsyncpa %s217, 1

</llo_original>
